<compile_context>
chip_gen: v7x
topology: tpu7x:2x2x1
jax: 0.10.0
libtpu: 0.0.40
codegen_flags: <defaults>
</compile_context>

<pallas_src>
import math

import jax
import jax.numpy as jnp
from jax.experimental import pallas as pl
from jax.experimental.pallas import tpu as pltpu


# ----------------------------------------------------------------------------
# Tiling constants / helpers
# ----------------------------------------------------------------------------
_TM_MAX = 256            # max rows per M tile
_TN_MAX = 1024           # max output-lane tile (lane-dense wide stores)
_TK_MAX = 1024           # max K tile when K must be split
_FULLK_K_MAX = 2048      # single-pass (no K grid, no accumulator) up to this Din
_VMEM_LIMIT = 32 * 1024 * 1024   # worst-case double-buffered footprint ~14 MiB


def _round_up(x, m):
    return ((x + m - 1) // m) * m


def _largest_tile(dim, cap, quantum=128):
    """Largest multiple of `quantum` that divides `dim` and is <= cap.
    `dim` must be a multiple of `quantum`."""
    best = quantum
    t = quantum
    lim = min(dim, cap)
    while t <= lim:
        if dim % t == 0:
            best = t
        t += quantum
    return best


# ----------------------------------------------------------------------------
# Pallas kernels
# ----------------------------------------------------------------------------
def _linear_fullk_kernel(x_ref, w_ref, b_ref, o_ref):
    # x: [tm, K] f32, w: [K, tn] bf16 (pre-transposed), b: [1, tn] f32.
    # Single K pass: no accumulator scratch, no init/finalize.
    acc = jnp.dot(x_ref[...].astype(w_ref.dtype), w_ref[...],
                  preferred_element_type=jnp.float32)
    o_ref[...] = (acc + b_ref[...]).astype(o_ref.dtype)


def _linear_tiledk_kernel(x_ref, w_ref, b_ref, o_ref, acc_ref):
    # Large-Din path: reduction (K) axis last, f32 VMEM accumulator.
    k = pl.program_id(2)

    @pl.when(k == 0)
    def _init():
        acc_ref[...] = jnp.zeros_like(acc_ref)

    acc_ref[...] += jnp.dot(x_ref[...].astype(w_ref.dtype), w_ref[...],
                            preferred_element_type=jnp.float32)

    @pl.when(k == pl.num_programs(2) - 1)
    def _done():
        o_ref[...] = (acc_ref[...] + b_ref[...]).astype(o_ref.dtype)


# ----------------------------------------------------------------------------
# Wrapper: y_padded = x @ w_t + b  (tiled for TPU, batch-aware)
# ----------------------------------------------------------------------------
def _run_linear(x, w_t, b_pad):
    """x: [B, Din] f32, w_t: [Kstore, Np] bf16 (pre-transposed, lane-dense),
    b_pad: [1, Np] f32.  Returns [Mp, Np] f32; callers slice rows/cols."""
    B, Din = x.shape
    Kstore, Np = w_t.shape
    assert b_pad.shape == (1, Np)
    assert Din <= Kstore

    # Batch-aware M tiling, recomputed from the actual batch every call
    # (XLA caches the compiled kernel per shape).
    if B <= _TM_MAX:
        Mp = _round_up(B, 8)
        tm = Mp
    else:
        tm = _TM_MAX
        Mp = _round_up(B, tm)

    # Zero-pad only when actually needed -- the common path is copy-free.
    if Mp != B or Kstore != Din:
        x = jnp.zeros((Mp, Kstore), x.dtype).at[:B, :Din].set(x)

    tn = _largest_tile(Np, _TN_MAX)
    flops = 2 * Mp * Np * Kstore
    bytes_accessed = (x.dtype.itemsize * Mp * Kstore
                      + w_t.dtype.itemsize * Kstore * Np
                      + 4 * Np + 4 * Mp * Np)

    if Kstore <= _FULLK_K_MAX:
        # Dominant small/medium-Din path: single K pass.
        # NOTE(v7x): with tiny Trajectron layers the (M,N) parallel grid may be
        # a single program; the Dout-concatenation fusion below widens N so
        # both TensorCores get work when enough models are fused.
        return pl.pallas_call(
            _linear_fullk_kernel,
            out_shape=jax.ShapeDtypeStruct((Mp, Np), jnp.float32),
            grid=(Mp // tm, Np // tn),
            in_specs=[
                pl.BlockSpec((tm, Kstore), lambda i, j: (i, 0)),
                pl.BlockSpec((Kstore, tn), lambda i, j: (0, j)),
                pl.BlockSpec((1, tn), lambda i, j: (0, j)),
            ],
            out_specs=pl.BlockSpec((tm, tn), lambda i, j: (i, j)),
            compiler_params=pltpu.CompilerParams(
                dimension_semantics=("parallel", "parallel"),
                vmem_limit_bytes=_VMEM_LIMIT,
            ),
            cost_estimate=pl.CostEstimate(
                flops=flops, transcendentals=0, bytes_accessed=bytes_accessed),
        )(x, w_t, b_pad)

    # Large-Din path: split K, f32 VMEM accumulator, reduction axis last.
    tk = _largest_tile(Kstore, _TK_MAX)
    return pl.pallas_call(
        _linear_tiledk_kernel,
        out_shape=jax.ShapeDtypeStruct((Mp, Np), jnp.float32),
        grid=(Mp // tm, Np // tn, Kstore // tk),
        in_specs=[
            pl.BlockSpec((tm, tk), lambda i, j, k: (i, k)),
            pl.BlockSpec((tk, tn), lambda i, j, k: (k, j)),
            pl.BlockSpec((1, tn), lambda i, j, k: (0, j)),
        ],
        out_specs=pl.BlockSpec((tm, tn), lambda i, j, k: (i, j)),
        scratch_shapes=[pltpu.VMEM((tm, tn), jnp.float32)],
        compiler_params=pltpu.CompilerParams(
            dimension_semantics=("parallel", "parallel", "arbitrary"),
            vmem_limit_bytes=_VMEM_LIMIT,
        ),
        cost_estimate=pl.CostEstimate(
            flops=flops, transcendentals=0, bytes_accessed=bytes_accessed),
    )(x, w_t, b_pad)


# ----------------------------------------------------------------------------
# A minimal "sub-model" (nn.Linear equivalent) that the registrar stores.
# ----------------------------------------------------------------------------
class LinearModel:
    def __init__(self, in_features, out_features, key,
                 weight_dtype=jnp.bfloat16):
        kw, kb = jax.random.split(key)
        bound = 1.0 / math.sqrt(in_features)
        # PyTorch-style uniform(-1/sqrt(fan_in), +1/sqrt(fan_in)) init (f32 master).
        self.weight = jax.random.uniform(
            kw, (out_features, in_features), jnp.float32, -bound, bound)
        self.bias = jax.random.uniform(
            kb, (out_features,), jnp.float32, -bound, bound)
        self.in_features = in_features
        self.out_features = out_features

        # One-time layout prep (init, not per call):
        #   * pre-transpose to [Din, Dout] so the MXU is fed natively,
        #   * pad Dout to 128 (lane-dense unmasked stores),
        #   * bf16 streaming copy of the weight (halves HBM W traffic),
        #   * K is left unpadded on the single-pass path.
        self.Np = _round_up(out_features, 128)
        if in_features <= _FULLK_K_MAX:
            self.Kstore = in_features
        else:
            self.Kstore = _round_up(in_features, 128)
        w_t = jnp.zeros((self.Kstore, self.Np), jnp.float32)
        w_t = w_t.at[:in_features, :out_features].set(self.weight.T)
        self.w_t = w_t.astype(weight_dtype)
        b = jnp.zeros((1, self.Np), jnp.float32)
        self.b_pad = b.at[0, :out_features].set(self.bias)

    def __call__(self, x):
        B, Din = x.shape
        assert Din == self.in_features
        y = _run_linear(x, self.w_t, self.b_pad)
        return y[:B, :self.out_features]

    def parameters(self):
        return [self.weight, self.bias]


def get_model_device(model):
    return list(model.parameters())[0].devices()


class FusedLinearGroup:
    """Dout-concatenation fusion: all registered Linears sharing `in_features`
    are evaluated with ONE wide, lane-dense matmul.  The concatenated weight /
    bias slabs are built once here and cached (no per-call stacking)."""

    def __init__(self, models):
        assert len(models) > 0
        din = models[0].in_features
        kstore = models[0].Kstore
        for m in models:
            assert m.in_features == din and m.Kstore == kstore
        self.models = list(models)
        self.in_features = din
        # Cached once: [Kstore, sum(Np_i)] bf16 weights, [1, sum(Np_i)] f32 bias.
        self.w_cat = jnp.concatenate([m.w_t for m in self.models], axis=1)
        self.b_cat = jnp.concatenate([m.b_pad for m in self.models], axis=1)
        offs, off = [], 0
        for m in self.models:
            offs.append(off)
            off += m.Np
        self.offsets = offs

    def __call__(self, x):
        B, Din = x.shape
        assert Din == self.in_features
        y = _run_linear(x, self.w_cat, self.b_cat)
        return [y[:B, off:off + m.out_features]
                for off, m in zip(self.offsets, self.models)]


_FUSED_CACHE = {}


def fused_linear_forward(models, x):
    """Convenience wrapper: one fused pallas_call for all same-Din models.
    The concatenated weights are cached per model tuple (not rebuilt per call)."""
    key = tuple(id(m) for m in models)
    group = _FUSED_CACHE.get(key)
    if group is None:
        group = FusedLinearGroup(models)
        _FUSED_CACHE[key] = group
    return group(x)


# ----------------------------------------------------------------------------
# ModelRegistrar: faithful port of the container semantics.
# ----------------------------------------------------------------------------
class ModelRegistrar:
    def __init__(self, model_dir, device):
        self.model_dict = {}
        self.model_dir = model_dir
        self.device = device

    def forward(self):
        raise NotImplementedError(
            "Although ModelRegistrar is a nn.Module, it is only to store parameters.")

    def get_model(self, name, model_if_absent=None):
        if name in self.model_dict:
            return self.model_dict[name]
        elif model_if_absent is not None:
            # JAX arrays already live on the default TPU device; .to() is a no-op.
            self.model_dict[name] = model_if_absent
            return self.model_dict[name]
        else:
            raise ValueError(f"{name} was never initialized in this Registrar!")

    def get_name_match(self, name):
        return [m for key, m in self.model_dict.items() if name in key]

    def get_all_but_name_match(self, name):
        return [m for key, m in self.model_dict.items() if name not in key]

    def print_model_names(self):
        print(list(self.model_dict.keys()))

    # TODO(synk): save_models / load_models / save_optimizer_and_scheduler /
    # load_optimizer_and_scheduler_dict are torch file I/O with no Pallas
    # equivalent; omitted per the no-file-IO constraint.

    def to(self, device):
        # JAX arrays are already committed to the default device; nothing to do.
        pass


# ----------------------------------------------------------------------------
# Demo / smoke test
# ----------------------------------------------------------------------------
if __name__ == "__main__":
    key = jax.random.PRNGKey(0)
    k_x1, k_x2, k_x3, k_m1, k_m2, k_m3, k_m4 = jax.random.split(key, 7)

    registrar = ModelRegistrar(model_dir="/tmp/unused", device=None)

    B, Din, Dout = 8, 32, 32
    enc = registrar.get_model("PEDESTRIAN/node_history_encoder",
                              LinearModel(Din, Dout, k_m1))
    edge = registrar.get_model("PEDESTRIAN/edge_encoder",
                               LinearModel(Din, Dout, k_m2))

    # Registrar container semantics (faithful to the PyTorch module).
    assert registrar.get_model("PEDESTRIAN/node_history_encoder") is enc
    assert len(registrar.get_name_match("node_history")) == 1
    assert len(registrar.get_all_but_name_match("node_history")) == 1
    try:
        registrar.forward()
        raise AssertionError("ModelRegistrar.forward() should have raised")
    except NotImplementedError:
        pass
    try:
        registrar.get_model("PEDESTRIAN/missing")
        raise AssertionError("missing-model lookup should have raised")
    except ValueError:
        pass

    # bf16 weight streaming + f32 accumulation -> loose-ish tolerances vs f32 ref.
    tol = dict(atol=3e-2, rtol=3e-2)

    # 1) Single registered sub-model through the single-pass (full-K) kernel.
    x = jax.random.normal(k_x1, (B, Din), jnp.float32)
    y = jax.block_until_ready(enc(x))
    assert y.shape == (B, Dout)
    assert jnp.allclose(y, x @ enc.weight.T + enc.bias, **tol)

    # 2) Dout-concatenation fusion: both registered encoders in ONE pallas_call,
    #    with the concatenated weights built once at group construction.
    fused = FusedLinearGroup(registrar.get_name_match("encoder"))
    outs = [jax.block_until_ready(o) for o in fused(x)]
    for out, mdl in zip(outs, fused.models):
        assert out.shape == (B, mdl.out_features)
        assert jnp.allclose(out, x @ mdl.weight.T + mdl.bias, **tol)

    # Cached convenience wrapper gives identical results.
    outs2 = [jax.block_until_ready(o) for o in fused_linear_forward([enc, edge], x)]
    for a, b in zip(outs, outs2):
        assert jnp.allclose(a, b)

    # 3) Batch-aware tiling + ragged batch / ragged Dout (padding path).
    dec = registrar.get_model("PEDESTRIAN/decoder", LinearModel(32, 48, k_m3))
    x3 = jax.random.normal(k_x2, (36, 32), jnp.float32)   # B not a multiple of 8
    y3 = jax.block_until_ready(dec(x3))
    assert y3.shape == (36, 48)
    assert jnp.allclose(y3, x3 @ dec.weight.T + dec.bias, **tol)

    # 4) Large-Din path (K-grid + f32 VMEM accumulator).
    big = registrar.get_model("PEDESTRIAN/big_state_encoder",
                              LinearModel(2304, 16, k_m4))
    x4 = jax.random.normal(k_x3, (4, 2304), jnp.float32)
    y4 = jax.block_until_ready(big(x4))
    assert y4.shape == (4, 16)
    assert jnp.allclose(y4, x4 @ big.weight.T + big.bias, **tol)

    print("KERNEL_OK")
</pallas_src>

<mosaic_0001>
module attributes {stable_mosaic.version = 11 : i64} {
  func.func @_linear_fullk_kernel(%arg0: i32, %arg1: i32, %arg2: memref<8x32xf32, #tpu.memory_space<vmem>>, %arg3: memref<32x128xbf16, #tpu.memory_space<vmem>>, %arg4: memref<1x128xf32, #tpu.memory_space<vmem>>, %arg5: memref<8x128xf32, #tpu.memory_space<vmem>>) attributes {dimension_semantics = [#tpu.dimension_semantics<parallel>, #tpu.dimension_semantics<parallel>], iteration_bounds = array<i64: 1, 1>, scalar_prefetch = 0 : i64, scratch_operands = 0 : i64, tpu.core_type = #tpu.core_type<tc>, window_params = [{transform_indices = @transform_0, window_bounds = array<i64: 8, 32>}, {transform_indices = @transform_1, window_bounds = array<i64: 32, 128>}, {transform_indices = @transform_2, window_bounds = array<i64: 1, 128>}, {transform_indices = @transform_3, window_bounds = array<i64: 8, 128>}]} {
    %c0 = arith.constant 0 : index
    %c0_0 = arith.constant 0 : index
    %0 = vector.load %arg2[%c0, %c0_0] : memref<8x32xf32, #tpu.memory_space<vmem>>, vector<8x32xf32>
    %1 = arith.truncf %0 : vector<8x32xf32> to vector<8x32xbf16>
    %c0_1 = arith.constant 0 : index
    %c0_2 = arith.constant 0 : index
    %2 = vector.load %arg3[%c0_1, %c0_2] : memref<32x128xbf16, #tpu.memory_space<vmem>>, vector<32x128xbf16>
    %cst = arith.constant dense<0.000000e+00> : vector<8x128xf32>
    %3 = tpu.matmul %1, %2, %cst {dimension_numbers = #tpu.dot_dimension_numbers<[1], [0], [0], [1], [0, 0, 1, 1], [], []>} : vector<8x32xbf16>, vector<32x128xbf16>, vector<8x128xf32> -> vector<8x128xf32>
    %c0_3 = arith.constant 0 : index
    %c0_4 = arith.constant 0 : index
    %4 = vector.load %arg4[%c0_3, %c0_4] : memref<1x128xf32, #tpu.memory_space<vmem>>, vector<1x128xf32>
    %5 = vector.broadcast %4 : vector<1x128xf32> to vector<8x128xf32>
    %6 = arith.addf %3, %5 : vector<8x128xf32>
    %c0_5 = arith.constant 0 : index
    %c0_6 = arith.constant 0 : index
    %7 = vector.load %arg5[%c0_5, %c0_6] : memref<8x128xf32, #tpu.memory_space<vmem>>, vector<8x128xf32>
    tpu.vector_store %arg5[%c0_5, %c0_6], %6 {strides = array<i32>} : memref<8x128xf32, #tpu.memory_space<vmem>>, vector<8x128xf32>,
    return
  }
  func.func @transform_0(%arg0: i32, %arg1: i32) -> (i32, i32) {
    %c0_i32 = arith.constant 0 : i32
    %c0_i32_0 = arith.constant 0 : i32
    return %arg0, %c0_i32 : i32, i32
  }
  func.func @transform_1(%arg0: i32, %arg1: i32) -> (i32, i32) {
    %c0_i32 = arith.constant 0 : i32
    %c0_i32_0 = arith.constant 0 : i32
    return %c0_i32, %arg1 : i32, i32
  }
  func.func @transform_2(%arg0: i32, %arg1: i32) -> (i32, i32) {
    %c0_i32 = arith.constant 0 : i32
    %c0_i32_0 = arith.constant 0 : i32
    return %c0_i32, %arg1 : i32, i32
  }
  func.func @transform_3(%arg0: i32, %arg1: i32) -> (i32, i32) {
    %c0_i32 = arith.constant 0 : i32
    return %arg0, %arg1 : i32, i32
  }
}

</mosaic_0001>

<llo_original>
// kernel: tpu_custom_call.1
$region0: #{tpu_custom_call.1}
  #allocation0 [shape = 'u32[]', space=smem, size = 0x4, offset = 0x4, fixed_abs, tag = 'smem constant byte address 0x4 - core index']
  #allocation1 [shape = 'u32[144,128]{1,0:T(1,128)}', space=vmem, size = 0x12000, scoped, tag = 'internal scratch']
  %s0 = inlined_call_operand.hbm [shape: f32[8,32], index: 0, kind: input, shape index: {}]
  %s1 = inlined_call_operand.hbm [shape: bf16[32,128], index: 1, kind: input, shape index: {}]
  %s2 = inlined_call_operand.vmem [shape: f32[1,128], index: 2, kind: input, shape index: {}]
  %s3 = inlined_call_operand.hbm [shape: f32[8,128], index: 3, kind: output, shape index: {}]
  %s4 = sld [smem:[#allocation0]]
  $region30: #{tpu_custom_call.1} parent=0
    _
  %s6 = ssub.s32 1, %s4
  %s7 = scalar_select 0, %s6, %s4
  $region1: #{tpu_custom_call.1} parent=0
    #allocation2 [shape = 'u8[4096]{0}', space=vmem, size = 0x1000, scoped, tag = 'input window, operand 0, single buffered']
    #allocation3 [shape = 's32[1]{0}', space=sflag, size = 0x4, scoped, tag = 'scoped memory for tpu_custom_call.1']
    #allocation4 [shape = 's32[1]{0}', space=sflag, size = 0x4, scoped, tag = 'scoped memory for tpu_custom_call.1']
    #allocation5 [shape = 'u8[8192]{0}', space=vmem, size = 0x2000, scoped, tag = 'input window, operand 1, single buffered']
    #allocation6 [shape = 's32[1]{0}', space=sflag, size = 0x4, scoped, tag = 'scoped memory for tpu_custom_call.1']
    #allocation7 [shape = 'u8[4096]{0}', space=vmem, size = 0x1000, scoped, tag = 'output window, operand 0, single buffered']
    %8 = vsyncpa [#allocation3], 0
    %9 = vsyncpa [#allocation6], 0
    %10 = vsyncpa [#allocation4], 0
    // Predicated region
    $region2: #{tpu_custom_call.1} parent=1 // pred_check
      _
    $region3: #{tpu_custom_call.1} parent=1 // pred_check_branch
      %12 = sbr.rel (0) target = $region5
    $region4: #{tpu_custom_call.1} parent=1 // pred_region
      %s14 = ssub.s32 128, 128
      %15 = vsyncadd [#allocation3], %s14
      %s17 = sshll.u32 [#allocation2], 4
      %s18 = int_to_ptr.vmem [resolvable:$true] %s17
      %20 = dma.hbm_to_vmem [thread:$0]  %s0, 128, %s18, [#allocation3]
    $region5: #{tpu_custom_call.1} parent=1 // pred_fallthru
      _
    // Predicated region
    $region6: #{tpu_custom_call.1} parent=1 // pred_check
      _
    $region7: #{tpu_custom_call.1} parent=1 // pred_check_branch
      %22 = sbr.rel (0) target = $region9
    $region8: #{tpu_custom_call.1} parent=1 // pred_region
      %s24 = ssub.s32 256, 256
      %25 = vsyncadd [#allocation6], %s24
      %s26 = sshll.u32 [#allocation5], 4
      %s27 = int_to_ptr.vmem [resolvable:$true] %s26
      %32 = dma.hbm_to_vmem [thread:$0]  %s1, 256, %s27, [#allocation6], 64, 64, 4
    $region9: #{tpu_custom_call.1} parent=1 // pred_fallthru
      _
    // Predicated region
    $region10: #{tpu_custom_call.1} parent=1 // pred_check
      _
    $region11: #{tpu_custom_call.1} parent=1 // pred_check_branch
      %34 = sbr.rel (0) target = $region13
    $region12: #{tpu_custom_call.1} parent=1 // pred_region
      _
    $region13: #{tpu_custom_call.1} parent=1 // pred_fallthru
      _
    // Predicated region
    $region14: #{tpu_custom_call.1} parent=1 // pred_check
      _
    $region15: #{tpu_custom_call.1} parent=1 // pred_check_branch
      %36 = sbr.rel (0) target = $region17
    $region16: #{tpu_custom_call.1} parent=1 // pred_region
      %37 = dma.done [#allocation3], 128
    $region17: #{tpu_custom_call.1} parent=1 // pred_fallthru
      _
    // Predicated region
    $region18: #{tpu_custom_call.1} parent=1 // pred_check
      _
    $region19: #{tpu_custom_call.1} parent=1 // pred_check_branch
      %39 = sbr.rel (0) target = $region21
    $region20: #{tpu_custom_call.1} parent=1 // pred_region
      %40 = dma.done [#allocation6], 256
    $region21: #{tpu_custom_call.1} parent=1 // pred_fallthru
      _
    %v42 = vld [vmem:[#allocation2] sm:$0xff]
    %v43 = vpack.c.bf16 %v42, %v42
    %v44 = vld [vmem:[#allocation5] sm:$0xf]
    %v45 = vld [vmem:[#allocation5 + $0x4] sm:$0xf]
    %v46 = vld [vmem:[#allocation5 + $0x8] sm:$0xf]
    %v47 = vld [vmem:[#allocation5 + $0xc] sm:$0xf]
    %v48 = vld [vmem:[%s2] sm:$0x1]
    %v50 = vlaneseq
    %v51 = vshrl.u32 %v50, 7
    %v52 = vsub.s32 0, %v51
    %v53 = vrot.slane %v48, %v52
    %v59 = vunpack.c.l.b16 %v44
    %v60 = vunpack.c.l.b16 %v45
    %v61 = vunpack.c.l.b16 %v46
    %v62 = vunpack.c.l.b16 %v47
    %v63 = vpack.c.b16 %v60, %v59
    %v64 = vpack.c.b16 %v62, %v61
    %vm67 = vcmask 261120
    %v69 = vsel %vm67, %v43, 0
    %71 = vmatprep.subr.bf16.mxu0 0
    %72 = vmatpush1.bf16.msra.mxu0 %v63
    %73 = vmatprep.subr.bf16.mxu0 0
    %74 = vmatpush1.bf16.msra.mxu0 %v64
    %75 = vmatprep.subr.bf16.mxu0 0
    %76 = vmatpush1.bf16.msra.mxu0 0
    %77 = vmatprep.subr.bf16.mxu0 0
    %78 = vmatpush1.bf16.msra.mxu0 0
    %79 = vmatprep.subr.bf16.mxu0 0
    %80 = vmatpush1.bf16.msra.mxu0 0
    %81 = vmatprep.subr.bf16.mxu0 0
    %82 = vmatpush1.bf16.msra.mxu0 0
    %83 = vmatprep.subr.bf16.mxu0 0
    %84 = vmatpush1.bf16.msra.mxu0 0
    %85 = vmatprep.subr.bf16.mxu0 0
    %86 = vmatpush1.bf16.msra.mxu0 0
    %87 = vmatprep.subr.bf16.mxu0 0
    %88 = vmatpush1.bf16.msra.mxu0 0
    %89 = vmatprep.subr.bf16.mxu0 0
    %90 = vmatpush1.bf16.msra.mxu0 0
    %91 = vmatprep.subr.bf16.mxu0 0
    %92 = vmatpush1.bf16.msra.mxu0 0
    %93 = vmatprep.subr.bf16.mxu0 0
    %94 = vmatpush1.bf16.msra.mxu0 0
    %95 = vmatprep.subr.bf16.mxu0 0
    %96 = vmatpush1.bf16.msra.mxu0 0
    %97 = vmatprep.subr.bf16.mxu0 0
    %98 = vmatpush1.bf16.msra.mxu0 0
    %99 = vmatprep.subr.bf16.mxu0 0
    %100 = vmatpush1.bf16.msra.mxu0 0
    %101 = vmatprep.subr.bf16.mxu0 0
    %102 = vmatpush1.bf16.msra.mxu0 0
    %103 = vmatprep.mubr.bf16.mxu0 0
    %104 = vmatmul.mubr.bf16.gmra.mrb[0].mxu0 %v69
    %v105 = vpop.f32.mrb[0].mxu0
    %v106 = vadd.f32 %v53, %v105
    %v107 = vpop.f32.mrb[0].mxu0
    %v108 = vpop.f32.mrb[0].mxu0
    %v109 = vpop.f32.mrb[0].mxu0
    %110 = vdwg.mxu0
    %111 = vst [vmem:[#allocation7] sm:$0xff] %v106
    // Predicated region
    $region22: #{tpu_custom_call.1} parent=1 // pred_check
      _
    $region23: #{tpu_custom_call.1} parent=1 // pred_check_branch
      %113 = sbr.rel (0) target = $region25
    $region24: #{tpu_custom_call.1} parent=1 // pred_region
      %s115 = ssub.s32 128, 128
      %116 = vsyncadd [#allocation4], %s115
      %s118 = sshll.u32 [#allocation7], 4
      %s119 = int_to_ptr.vmem [resolvable:$true] %s118
      %121 = dma.vmem_to_hbm [thread:$0]  %s119, 128, %s3, [#allocation4]
    $region25: #{tpu_custom_call.1} parent=1 // pred_fallthru
      _
    // Predicated region
    $region26: #{tpu_custom_call.1} parent=1 // pred_check
      _
    $region27: #{tpu_custom_call.1} parent=1 // pred_check_branch
      %123 = sbr.rel (0) target = $region29
    $region28: #{tpu_custom_call.1} parent=1 // pred_region
      %124 = dma.done [#allocation4], 128
    $region29: #{tpu_custom_call.1} parent=1 // pred_fallthru
      _
    %125 = vsyncpa [#allocation3], 1
    %126 = vsyncpa [#allocation6], 1
    %127 = vsyncpa [#allocation4], 1

</llo_original>
